<compile_context>
chip_gen: v7x
topology: tpu7x:2x2x1
jax: 0.10.0
libtpu: 0.0.40
codegen_flags: <defaults>
</compile_context>

<pallas_src>
import jax
import jax.numpy as jnp
from jax.experimental import pallas as pl
from jax.experimental.pallas import tpu as pltpu


def _itm_head_kernel(x_ref, w_ref, b_ref, o_ref):
    # x_ref: [TM, H]  (VMEM, streamed / double-buffered)
    # w_ref: [H, n_out] (VMEM, resident: constant index_map)
    # b_ref: [1, n_out] f32 (VMEM, resident)
    # o_ref: [TM, n_out]
    acc = jnp.dot(x_ref[...], w_ref[...], preferred_element_type=jnp.float32)
    o_ref[...] = (acc + b_ref[...]).astype(o_ref.dtype)


def _round_up(x, m):
    return (x + m - 1) // m * m


def _vmem_capacity_bytes():
    # Per-core VMEM capacity; conservative 64 MiB (v7x per-TC) fallback.
    try:
        info = pltpu.get_tpu_info()
        cap = getattr(info, "vmem_capacity_bytes", None)
        if cap:
            return int(cap)
    except Exception:
        pass
    return 64 * 1024 * 1024


def _m_axis_semantics():
    # Only core_parallel actually changes codegen / splits a grid axis across
    # the two TensorCores on v7x; PARALLEL elsewhere (harmless on 1-TC chips).
    try:
        kind = jax.devices()[0].device_kind.lower()
    except Exception:
        kind = ""
    if "v7" in kind:
        return (pltpu.CORE_PARALLEL,)
    return (pltpu.PARALLEL,)


def itm_head(x, weight, bias, *, tm=2048):
    """Equivalent of `nn.Linear(hidden_size, 2)` forward.

    x:      [..., hidden]
    weight: [n_out, hidden]   (PyTorch layout)
    bias:   [n_out]
    returns [..., n_out]
    """
    hidden = x.shape[-1]
    n_out = weight.shape[0]
    lead = x.shape[:-1]
    m = 1
    for d in lead:
        m *= d
    x2d = x.reshape(m, hidden)

    # One-time tiny relayouts in the wrapper (not per grid step).
    w_t = jnp.transpose(weight).astype(x.dtype)              # [H, n_out]
    b2 = jnp.reshape(bias, (1, n_out)).astype(jnp.float32)   # f32 add on f32 acc

    itemsize = jnp.dtype(x.dtype).itemsize
    sublane = max(8, 32 // itemsize)          # 8 (f32) / 16 (bf16) / 32 (int8)
    lane = 128
    n_buf = 2                                 # Pallas double-buffers the x stream

    # x-tile budget: ~40% of this chip's VMEM for the two in-flight x tiles,
    # capped at 48 MiB (v5e/v6e) and ~25 MiB on v7x's 64 MiB/TC.
    vmem_cap = _vmem_capacity_bytes()
    x_buf_budget = min(max(vmem_cap * 2 // 5, 8 << 20), 48 << 20)
    max_tm = max(
        sublane,
        (x_buf_budget // (n_buf * hidden * itemsize)) // sublane * sublane,
    )
    tm_eff = min(_round_up(max(m, 1), sublane), _round_up(tm, sublane), max_tm)

    # Ragged grid: Pallas pads the last x block and drops OOB output rows.
    grid = (pl.cdiv(m, tm_eff),)

    # VMEM limit: actual working set (lane-padded) + margin, clamped to chip.
    out_cols_pad = _round_up(n_out, lane)
    vmem_needed = (
        n_buf * tm_eff * hidden * itemsize            # x tiles
        + n_buf * tm_eff * out_cols_pad * itemsize    # output tiles (lane-padded)
        + 2 * _round_up(hidden, sublane) * out_cols_pad * 4  # weight + bias
        + (4 << 20)
    )
    vmem_limit = int(min(vmem_cap, max(vmem_needed, 32 << 20)))

    out = pl.pallas_call(
        _itm_head_kernel,
        out_shape=jax.ShapeDtypeStruct((m, n_out), x.dtype),
        grid_spec=pltpu.PrefetchScalarGridSpec(
            num_scalar_prefetch=0,
            grid=grid,
            in_specs=[
                # x: streamed in TM-row tiles, double-buffered by Pallas.
                pl.BlockSpec((tm_eff, hidden), lambda i: (i, 0)),
                # weight: tiny, resident in VMEM for the whole grid.
                pl.BlockSpec((hidden, n_out), lambda i: (0, 0)),
                # bias: tiny resident VMEM block, broadcast-added in f32.
                pl.BlockSpec((1, n_out), lambda i: (0, 0)),
            ],
            out_specs=pl.BlockSpec((tm_eff, n_out), lambda i: (i, 0)),
        ),
        compiler_params=pltpu.CompilerParams(
            dimension_semantics=_m_axis_semantics(),
            vmem_limit_bytes=vmem_limit,
        ),
    )(x2d, w_t, b2)

    return out.reshape(*lead, n_out)


if __name__ == "__main__":
    key = jax.random.PRNGKey(0)
    k_x, k_w, k_b, k_x2 = jax.random.split(key, 4)

    batch, hidden = 2, 32

    # Deterministic init mimicking nn.Linear's U(-1/sqrt(H), 1/sqrt(H)).
    bound = 1.0 / (hidden ** 0.5)
    weight = jax.random.uniform(k_w, (2, hidden), jnp.float32, -bound, bound)
    bias = jax.random.uniform(k_b, (2,), jnp.float32, -bound, bound)

    x = jax.random.normal(k_x, (batch, hidden), jnp.float32)
    out = itm_head(x, weight, bias)
    jax.block_until_ready(out)

    ref = x @ weight.T + bias
    assert out.shape == (batch, 2)
    assert jnp.allclose(out, ref, atol=1e-5, rtol=1e-5)

    # Ragged multi-tile path: 21 rows with an 8-row tile -> 3 grid steps with
    # a Pallas-padded last block (no wrapper-side jnp.pad anywhere).
    x2 = jax.random.normal(k_x2, (3, 7, hidden), jnp.float32)
    out2 = itm_head(x2, weight, bias, tm=8)
    jax.block_until_ready(out2)

    ref2 = x2 @ weight.T + bias
    assert out2.shape == (3, 7, 2)
    assert jnp.allclose(out2, ref2, atol=1e-5, rtol=1e-5)

    print("KERNEL_OK")
</pallas_src>

<mosaic_0001>
module attributes {stable_mosaic.version = 11 : i64} {
  func.func @_itm_head_kernel(%arg0: i32, %arg1: memref<8x32xf32, #tpu.memory_space<vmem>>, %arg2: memref<32x2xf32, #tpu.memory_space<vmem>>, %arg3: memref<1x2xf32, #tpu.memory_space<vmem>>, %arg4: memref<8x2xf32, #tpu.memory_space<vmem>>) attributes {dimension_semantics = [#tpu.dimension_semantics<parallel>], iteration_bounds = array<i64: 1>, scalar_prefetch = 0 : i64, scratch_operands = 0 : i64, tpu.core_type = #tpu.core_type<tc>, window_params = [{transform_indices = @transform_0, window_bounds = array<i64: 8, 32>}, {pipeline_mode = #tpu.pipeline_mode<synchronous>, transform_indices = @transform_1, window_bounds = array<i64: 32, 2>}, {pipeline_mode = #tpu.pipeline_mode<synchronous>, transform_indices = @transform_2, window_bounds = array<i64: 1, 2>}, {transform_indices = @transform_3, window_bounds = array<i64: 8, 2>}]} {
    %c0 = arith.constant 0 : index
    %c0_0 = arith.constant 0 : index
    %0 = vector.load %arg1[%c0, %c0_0] : memref<8x32xf32, #tpu.memory_space<vmem>>, vector<8x32xf32>
    %c0_1 = arith.constant 0 : index
    %c0_2 = arith.constant 0 : index
    %1 = vector.load %arg2[%c0_1, %c0_2] : memref<32x2xf32, #tpu.memory_space<vmem>>, vector<32x2xf32>
    %cst = arith.constant dense<0.000000e+00> : vector<8x2xf32>
    %2 = tpu.matmul %0, %1, %cst {dimension_numbers = #tpu.dot_dimension_numbers<[1], [0], [0], [1], [0, 0, 1, 1], [], []>} : vector<8x32xf32>, vector<32x2xf32>, vector<8x2xf32> -> vector<8x2xf32>
    %c0_3 = arith.constant 0 : index
    %c0_4 = arith.constant 0 : index
    %3 = vector.load %arg3[%c0_3, %c0_4] : memref<1x2xf32, #tpu.memory_space<vmem>>, vector<1x2xf32>
    %4 = vector.broadcast %3 : vector<1x2xf32> to vector<8x2xf32>
    %5 = arith.addf %2, %4 : vector<8x2xf32>
    %c0_5 = arith.constant 0 : index
    %c0_6 = arith.constant 0 : index
    %6 = vector.load %arg4[%c0_5, %c0_6] : memref<8x2xf32, #tpu.memory_space<vmem>>, vector<8x2xf32>
    tpu.vector_store %arg4[%c0_5, %c0_6], %5 {strides = array<i32>} : memref<8x2xf32, #tpu.memory_space<vmem>>, vector<8x2xf32>,
    return
  }
  func.func @transform_0(%arg0: i32) -> (i32, i32) {
    %c0_i32 = arith.constant 0 : i32
    %c0_i32_0 = arith.constant 0 : i32
    return %arg0, %c0_i32 : i32, i32
  }
  func.func @transform_1(%arg0: i32) -> (i32, i32) {
    %c0_i32 = arith.constant 0 : i32
    %c0_i32_0 = arith.constant 0 : i32
    %c0_i32_1 = arith.constant 0 : i32
    return %c0_i32, %c0_i32_0 : i32, i32
  }
  func.func @transform_2(%arg0: i32) -> (i32, i32) {
    %c0_i32 = arith.constant 0 : i32
    %c0_i32_0 = arith.constant 0 : i32
    %c0_i32_1 = arith.constant 0 : i32
    return %c0_i32, %c0_i32_0 : i32, i32
  }
  func.func @transform_3(%arg0: i32) -> (i32, i32) {
    %c0_i32 = arith.constant 0 : i32
    %c0_i32_0 = arith.constant 0 : i32
    return %arg0, %c0_i32 : i32, i32
  }
}

</mosaic_0001>

<llo_original>
// kernel: tpu_custom_call.1
$region0: #{tpu_custom_call.1}
  #allocation0 [shape = 'u32[]', space=smem, size = 0x4, offset = 0x4, fixed_abs, tag = 'smem constant byte address 0x4 - core index']
  #allocation1 [shape = 'u32[144,128]{1,0:T(1,128)}', space=vmem, size = 0x12000, scoped, tag = 'internal scratch']
  %s0 = inlined_call_operand.vmem [shape: f32[2,32], index: 0, kind: input, shape index: {}]
  %s1 = inlined_call_operand.vmem [shape: f32[32,2], index: 1, kind: input, shape index: {}]
  %s2 = inlined_call_operand.vmem [shape: f32[1,2], index: 2, kind: input, shape index: {}]
  %s3 = inlined_call_operand.hbm [shape: f32[2,2], index: 3, kind: output, shape index: {}]
  %s4 = sld [smem:[#allocation0]]
  $region22: #{tpu_custom_call.1} parent=0
    _
  %s6 = ssub.s32 1, %s4
  %s7 = scalar_select 0, %s6, %s4
  $region1: #{tpu_custom_call.1} parent=0
    #allocation2 [shape = 'u8[4096]{0}', space=vmem, size = 0x1000, scoped, tag = 'output window, operand 0, single buffered']
    #allocation3 [shape = 's32[1]{0}', space=sflag, size = 0x4, scoped, tag = 'scoped memory for tpu_custom_call.1']
    %8 = vsyncpa [#allocation3], 0
    // Predicated region
    $region2: #{tpu_custom_call.1} parent=1 // pred_check
      _
    $region3: #{tpu_custom_call.1} parent=1 // pred_check_branch
      %10 = sbr.rel (0) target = $region5
    $region4: #{tpu_custom_call.1} parent=1 // pred_region
      _
    $region5: #{tpu_custom_call.1} parent=1 // pred_fallthru
      _
    // Predicated region
    $region6: #{tpu_custom_call.1} parent=1 // pred_check
      _
    $region7: #{tpu_custom_call.1} parent=1 // pred_check_branch
      %12 = sbr.rel (0) target = $region9
    $region8: #{tpu_custom_call.1} parent=1 // pred_region
      _
    $region9: #{tpu_custom_call.1} parent=1 // pred_fallthru
      _
    // Predicated region
    $region10: #{tpu_custom_call.1} parent=1 // pred_check
      _
    $region11: #{tpu_custom_call.1} parent=1 // pred_check_branch
      %14 = sbr.rel (0) target = $region13
    $region12: #{tpu_custom_call.1} parent=1 // pred_region
      _
    $region13: #{tpu_custom_call.1} parent=1 // pred_fallthru
      _
    %v15 = vld [vmem:[%s0] sm:$0xff]
    %v16 = vld [vmem:[%s1] sm:$0xff]
    %v17 = vld [vmem:[%s1 + $0x8] sm:$0xff]
    %v18 = vld [vmem:[%s1 + $0x10] sm:$0xff]
    %v19 = vld [vmem:[%s1 + $0x18] sm:$0xff]
    %v20 = vld [vmem:[%s2] sm:$0x1]
    %v22 = vlaneseq
    %v23 = vshrl.u32 %v22, 7
    %v24 = vsub.s32 0, %v23
    %v25 = vrot.slane %v20, %v24
    %vm27 = vcmask 261120
    %v29 = vsel %vm27, %v15, 0
    %31 = vmatprep.subr.mxu0 0.0
    %32 = vmatpush1.msra.mxu0 %v16
    %33 = vmatprep.subr.mxu0 0.0
    %34 = vmatpush1.msra.mxu0 %v17
    %35 = vmatprep.subr.mxu0 0.0
    %36 = vmatpush1.msra.mxu0 %v18
    %37 = vmatprep.subr.mxu0 0.0
    %38 = vmatpush1.msra.mxu0 %v19
    %39 = vmatprep.subr.mxu0 0.0
    %40 = vmatpush1.msra.mxu0 0.0
    %41 = vmatprep.subr.mxu0 0.0
    %42 = vmatpush1.msra.mxu0 0.0
    %43 = vmatprep.subr.mxu0 0.0
    %44 = vmatpush1.msra.mxu0 0.0
    %45 = vmatprep.subr.mxu0 0.0
    %46 = vmatpush1.msra.mxu0 0.0
    %47 = vmatprep.subr.mxu0 0.0
    %48 = vmatpush1.msra.mxu0 0.0
    %49 = vmatprep.subr.mxu0 0.0
    %50 = vmatpush1.msra.mxu0 0.0
    %51 = vmatprep.subr.mxu0 0.0
    %52 = vmatpush1.msra.mxu0 0.0
    %53 = vmatprep.subr.mxu0 0.0
    %54 = vmatpush1.msra.mxu0 0.0
    %55 = vmatprep.subr.mxu0 0.0
    %56 = vmatpush1.msra.mxu0 0.0
    %57 = vmatprep.subr.mxu0 0.0
    %58 = vmatpush1.msra.mxu0 0.0
    %59 = vmatprep.subr.mxu0 0.0
    %60 = vmatpush1.msra.mxu0 0.0
    %61 = vmatprep.subr.mxu0 0.0
    %62 = vmatpush1.msra.mxu0 0.0
    %63 = vmatprep.subr.mxu0 0.0
    %64 = vmatpush1.msra.mxu0 0.0
    %65 = vmatprep.subr.mxu0 0.0
    %66 = vmatpush1.msra.mxu0 0.0
    %67 = vmatprep.subr.mxu0 0.0
    %68 = vmatpush1.msra.mxu0 0.0
    %69 = vmatprep.subr.mxu0 0.0
    %70 = vmatpush1.msra.mxu0 0.0
    %71 = vmatprep.subr.mxu0 0.0
    %72 = vmatpush1.msra.mxu0 0.0
    %73 = vmatprep.subr.mxu0 0.0
    %74 = vmatpush1.msra.mxu0 0.0
    %75 = vmatprep.subr.mxu0 0.0
    %76 = vmatpush1.msra.mxu0 0.0
    %77 = vmatprep.subr.mxu0 0.0
    %78 = vmatpush1.msra.mxu0 0.0
    %79 = vmatprep.subr.mxu0 0.0
    %80 = vmatpush1.msra.mxu0 0.0
    %81 = vmatprep.subr.mxu0 0.0
    %82 = vmatpush1.msra.mxu0 0.0
    %83 = vmatprep.subr.mxu0 0.0
    %84 = vmatpush1.msra.mxu0 0.0
    %85 = vmatprep.subr.mxu0 0.0
    %86 = vmatpush1.msra.mxu0 0.0
    %87 = vmatprep.subr.mxu0 0.0
    %88 = vmatpush1.msra.mxu0 0.0
    %89 = vmatprep.subr.mxu0 0.0
    %90 = vmatpush1.msra.mxu0 0.0
    %91 = vmatprep.subr.mxu0 0.0
    %92 = vmatpush1.msra.mxu0 0.0
    %93 = vmatprep.subr.mxu0 0.0
    %94 = vmatpush1.msra.mxu0 0.0
    %95 = vmatprep.mubr.f32.mxu0 0.0
    %96 = vmatmul.mubr.f32.gmra.mrb[0].mxu0 %v29
    %v97 = vpop.f32.mrb[0].mxu0
    %v98 = vadd.f32 %v25, %v97
    %v99 = vpop.f32.mrb[0].mxu0
    %100 = vdwg.mxu0
    %vm101 = vcmask 15360
    %102 = vst.msk [vmem:[#allocation2] sm:$0xff] %vm101, %v98
    // Predicated region
    $region14: #{tpu_custom_call.1} parent=1 // pred_check
      _
    $region15: #{tpu_custom_call.1} parent=1 // pred_check_branch
      %104 = sbr.rel (0) target = $region17
    $region16: #{tpu_custom_call.1} parent=1 // pred_region
      %s106 = ssub.s32 128, 32
      %107 = vsyncadd [#allocation3], %s106
      %s108 = sshll.u32 [#allocation2], 4
      %s109 = int_to_ptr.vmem [resolvable:$true] %s108
      %114 = dma.vmem_to_hbm [thread:$0]  %s109, 32, %s3, [#allocation3], 32, 32, 2
    $region17: #{tpu_custom_call.1} parent=1 // pred_fallthru
      _
    // Predicated region
    $region18: #{tpu_custom_call.1} parent=1 // pred_check
      _
    $region19: #{tpu_custom_call.1} parent=1 // pred_check_branch
      %116 = sbr.rel (0) target = $region21
    $region20: #{tpu_custom_call.1} parent=1 // pred_region
      %117 = dma.done [#allocation3], 128
    $region21: #{tpu_custom_call.1} parent=1 // pred_fallthru
      _
    %118 = vsyncpa [#allocation3], 1

</llo_original>
